<compile_context>
chip_gen: v5e
topology: v5e:2x2
jax: 0.10.0
libtpu: 0.0.40
codegen_flags: <defaults>
</compile_context>

<pallas_src>
import functools

import jax
import jax.numpy as jnp
from jax.experimental import pallas as pl
from jax.experimental.pallas import tpu as pltpu

_LANE = 128
_MIB = 1024 * 1024


def _l2_loss_kernel(pred_ref, gt_ref, out_ref, *, num_channels, inv_c):
    # pred_ref/gt_ref: (1, C, RT, COLS) VMEM tiles; out_ref: (1, RT, COLS).
    d = pred_ref[0, 0] - gt_ref[0, 0]           # subtract in input dtype (VPU)
    df = d.astype(jnp.float32)
    acc = df * df                               # square + accumulate in f32
    for c in range(1, num_channels):            # unrolled: C-1 fused VPU adds
        d = pred_ref[0, c] - gt_ref[0, c]
        df = d.astype(jnp.float32)
        acc = acc + df * df
    # NOTE: * (1/C) (hoisted) differs from / C by ~1 ulp for non-pow2 C.
    out_ref[0] = (acc * inv_c).astype(out_ref.dtype)


def _vmem_capacity_bytes():
    try:
        info = pltpu.get_tpu_info()
        cap = getattr(info, "vmem_capacity_bytes", None)
        if cap:
            return int(cap)
    except Exception:
        pass
    return 64 * _MIB  # conservative fallback (v7x per-TC size)


def l2_loss_wrapper(pred_img, gt_img):
    """Equivalent of L2LossWrapper.forward for NCHW inputs."""
    assert pred_img.shape == gt_img.shape, "pred/gt shape mismatch"
    assert pred_img.dtype == gt_img.dtype, "pred/gt dtype mismatch"
    B, C, H, W = pred_img.shape
    HW = H * W
    itemsize = jnp.dtype(pred_img.dtype).itemsize

    # Spatial view: lane-dense (rows, 128) when possible (free reshape, no
    # copy), otherwise the original (H, W) with the full W as the lane dim.
    if HW % _LANE == 0:
        rows, cols = HW // _LANE, _LANE
    else:
        rows, cols = H, W
    pred_v = pred_img.reshape(B, C, rows, cols)
    gt_v = gt_img.reshape(B, C, rows, cols)

    # Sublane packing multiple for the row-tile (f32:8, bf16:16, int8/fp8:32).
    sub = {4: 8, 2: 16, 1: 32}.get(itemsize, 8)

    # Generation-aware VMEM budget for the double-buffered resident footprint.
    vmem_cap = _vmem_capacity_bytes()
    budget = (vmem_cap * 3) // 4
    cols_pad = pl.cdiv(cols, _LANE) * _LANE               # VMEM lane padding
    per_row_bytes = 2 * (2 * C * cols_pad * itemsize + cols_pad * itemsize)
    row_cap = max(sub, (budget // per_row_bytes) // sub * sub)
    row_cap = min(row_cap, 2048)

    if rows <= row_cap:
        row_tile = rows          # full-extent tile: no (8,128) divisibility issue
    else:
        row_tile = row_cap       # multiple of `sub`; ragged last tile is masked
    n_tiles = pl.cdiv(rows, row_tile)

    # Put the larger parallel axis first so v7x's 2 TensorCores split evenly.
    if n_tiles >= B:
        grid = (n_tiles, B)
        in_map = lambda t, b: (b, 0, t, 0)
        out_map = lambda t, b: (b, t, 0)
    else:
        grid = (B, n_tiles)
        in_map = lambda b, t: (b, 0, t, 0)
        out_map = lambda b, t: (b, t, 0)

    rt_pad = pl.cdiv(row_tile, sub) * sub
    in_block_bytes = C * rt_pad * cols_pad * itemsize
    out_block_bytes = rt_pad * cols_pad * itemsize
    footprint = 2 * (2 * in_block_bytes + out_block_bytes)  # double-buffered
    vmem_limit = int(min(vmem_cap, max(footprint + 8 * _MIB, 32 * _MIB)))

    kernel = functools.partial(
        _l2_loss_kernel, num_channels=C, inv_c=1.0 / float(C)
    )

    out_rows = pl.pallas_call(
        kernel,
        out_shape=jax.ShapeDtypeStruct((B, rows, cols), pred_img.dtype),
        grid_spec=pltpu.PrefetchScalarGridSpec(
            num_scalar_prefetch=0,
            grid=grid,
            in_specs=[
                pl.BlockSpec((1, C, row_tile, cols), in_map),
                pl.BlockSpec((1, C, row_tile, cols), in_map),
            ],
            out_specs=pl.BlockSpec((1, row_tile, cols), out_map),
        ),
        compiler_params=pltpu.CompilerParams(
            dimension_semantics=("parallel", "parallel"),
            vmem_limit_bytes=vmem_limit,
        ),
    )(pred_v, gt_v)

    return out_rows.reshape(B, H, W)


if __name__ == "__main__":
    key = jax.random.PRNGKey(0)
    k_pred, k_gt, k_pred2, k_gt2 = jax.random.split(key, 4)

    # Primary case: lane-aligned spatial dim (HW % 128 == 0).
    B, C, H, W = 2, 4, 16, 16
    pred = jax.random.normal(k_pred, (B, C, H, W), dtype=jnp.float32)
    gt = jax.random.normal(k_gt, (B, C, H, W), dtype=jnp.float32)
    out = jax.block_until_ready(l2_loss_wrapper(pred, gt))
    ref = jnp.mean((pred - gt) ** 2, axis=1)
    assert out.shape == (B, H, W)
    assert jnp.allclose(out, ref, atol=1e-6, rtol=1e-6)

    # Secondary case: non-aligned spatial dims (no pad path, full-dim blocks).
    B2, C2, H2, W2 = 2, 3, 7, 9
    pred2 = jax.random.normal(k_pred2, (B2, C2, H2, W2), dtype=jnp.float32)
    gt2 = jax.random.normal(k_gt2, (B2, C2, H2, W2), dtype=jnp.float32)
    out2 = jax.block_until_ready(l2_loss_wrapper(pred2, gt2))
    ref2 = jnp.mean((pred2 - gt2) ** 2, axis=1)
    assert out2.shape == (B2, H2, W2)
    assert jnp.allclose(out2, ref2, atol=1e-6, rtol=1e-5)

    print("KERNEL_OK")
</pallas_src>

<mosaic_0001>
module attributes {stable_mosaic.version = 11 : i64} {
  func.func @_l2_loss_kernel(%arg0: i32, %arg1: i32, %arg2: memref<1x4x2x128xf32, #tpu.memory_space<vmem>>, %arg3: memref<1x4x2x128xf32, #tpu.memory_space<vmem>>, %arg4: memref<1x2x128xf32, #tpu.memory_space<vmem>>) attributes {dimension_semantics = [#tpu.dimension_semantics<parallel>, #tpu.dimension_semantics<parallel>], iteration_bounds = array<i64: 2, 1>, scalar_prefetch = 0 : i64, scratch_operands = 0 : i64, tpu.core_type = #tpu.core_type<tc>, window_params = [{transform_indices = @transform_0, window_bounds = array<i64: 1, 4, 2, 128>}, {transform_indices = @transform_1, window_bounds = array<i64: 1, 4, 2, 128>}, {transform_indices = @transform_2, window_bounds = array<i64: 1, 2, 128>}]} {
    %c0 = arith.constant 0 : index
    %c0_0 = arith.constant 0 : index
    %c0_1 = arith.constant 0 : index
    %c0_2 = arith.constant 0 : index
    %0 = vector.load %arg2[%c0, %c0_0, %c0_1, %c0_2] : memref<1x4x2x128xf32, #tpu.memory_space<vmem>>, vector<1x1x2x128xf32>
    %1 = vector.shape_cast %0 : vector<1x1x2x128xf32> to vector<2x128xf32>
    %c0_3 = arith.constant 0 : index
    %c0_4 = arith.constant 0 : index
    %c0_5 = arith.constant 0 : index
    %c0_6 = arith.constant 0 : index
    %2 = vector.load %arg3[%c0_3, %c0_4, %c0_5, %c0_6] : memref<1x4x2x128xf32, #tpu.memory_space<vmem>>, vector<1x1x2x128xf32>
    %3 = vector.shape_cast %2 : vector<1x1x2x128xf32> to vector<2x128xf32>
    %4 = arith.subf %1, %3 : vector<2x128xf32>
    %5 = arith.mulf %4, %4 : vector<2x128xf32>
    %c0_7 = arith.constant 0 : index
    %c1 = arith.constant 1 : index
    %c0_8 = arith.constant 0 : index
    %c0_9 = arith.constant 0 : index
    %6 = vector.load %arg2[%c0_7, %c1, %c0_8, %c0_9] : memref<1x4x2x128xf32, #tpu.memory_space<vmem>>, vector<1x1x2x128xf32>
    %7 = vector.shape_cast %6 : vector<1x1x2x128xf32> to vector<2x128xf32>
    %c0_10 = arith.constant 0 : index
    %c1_11 = arith.constant 1 : index
    %c0_12 = arith.constant 0 : index
    %c0_13 = arith.constant 0 : index
    %8 = vector.load %arg3[%c0_10, %c1_11, %c0_12, %c0_13] : memref<1x4x2x128xf32, #tpu.memory_space<vmem>>, vector<1x1x2x128xf32>
    %9 = vector.shape_cast %8 : vector<1x1x2x128xf32> to vector<2x128xf32>
    %10 = arith.subf %7, %9 : vector<2x128xf32>
    %11 = arith.mulf %10, %10 : vector<2x128xf32>
    %12 = arith.addf %5, %11 : vector<2x128xf32>
    %c0_14 = arith.constant 0 : index
    %c2 = arith.constant 2 : index
    %c0_15 = arith.constant 0 : index
    %c0_16 = arith.constant 0 : index
    %13 = vector.load %arg2[%c0_14, %c2, %c0_15, %c0_16] : memref<1x4x2x128xf32, #tpu.memory_space<vmem>>, vector<1x1x2x128xf32>
    %14 = vector.shape_cast %13 : vector<1x1x2x128xf32> to vector<2x128xf32>
    %c0_17 = arith.constant 0 : index
    %c2_18 = arith.constant 2 : index
    %c0_19 = arith.constant 0 : index
    %c0_20 = arith.constant 0 : index
    %15 = vector.load %arg3[%c0_17, %c2_18, %c0_19, %c0_20] : memref<1x4x2x128xf32, #tpu.memory_space<vmem>>, vector<1x1x2x128xf32>
    %16 = vector.shape_cast %15 : vector<1x1x2x128xf32> to vector<2x128xf32>
    %17 = arith.subf %14, %16 : vector<2x128xf32>
    %18 = arith.mulf %17, %17 : vector<2x128xf32>
    %19 = arith.addf %12, %18 : vector<2x128xf32>
    %c0_21 = arith.constant 0 : index
    %c3 = arith.constant 3 : index
    %c0_22 = arith.constant 0 : index
    %c0_23 = arith.constant 0 : index
    %20 = vector.load %arg2[%c0_21, %c3, %c0_22, %c0_23] : memref<1x4x2x128xf32, #tpu.memory_space<vmem>>, vector<1x1x2x128xf32>
    %21 = vector.shape_cast %20 : vector<1x1x2x128xf32> to vector<2x128xf32>
    %c0_24 = arith.constant 0 : index
    %c3_25 = arith.constant 3 : index
    %c0_26 = arith.constant 0 : index
    %c0_27 = arith.constant 0 : index
    %22 = vector.load %arg3[%c0_24, %c3_25, %c0_26, %c0_27] : memref<1x4x2x128xf32, #tpu.memory_space<vmem>>, vector<1x1x2x128xf32>
    %23 = vector.shape_cast %22 : vector<1x1x2x128xf32> to vector<2x128xf32>
    %24 = arith.subf %21, %23 : vector<2x128xf32>
    %25 = arith.mulf %24, %24 : vector<2x128xf32>
    %26 = arith.addf %19, %25 : vector<2x128xf32>
    %cst = arith.constant 2.500000e-01 : f32
    %27 = vector.broadcast %cst : f32 to vector<2x128xf32>
    %28 = arith.mulf %26, %27 : vector<2x128xf32>
    %c0_28 = arith.constant 0 : index
    %c0_29 = arith.constant 0 : index
    %c0_30 = arith.constant 0 : index
    %29 = vector.load %arg4[%c0_28, %c0_29, %c0_30] : memref<1x2x128xf32, #tpu.memory_space<vmem>>, vector<1x2x128xf32>
    %30 = vector.shape_cast %29 : vector<1x2x128xf32> to vector<2x128xf32>
    %31 = vector.shape_cast %28 : vector<2x128xf32> to vector<1x2x128xf32>
    tpu.vector_store %arg4[%c0_28, %c0_29, %c0_30], %31 {strides = array<i32>} : memref<1x2x128xf32, #tpu.memory_space<vmem>>, vector<1x2x128xf32>,
    return
  }
  func.func @transform_0(%arg0: i32, %arg1: i32) -> (i32, i32, i32, i32) {
    %c0_i32 = arith.constant 0 : i32
    %c0_i32_0 = arith.constant 0 : i32
    %c0_i32_1 = arith.constant 0 : i32
    return %arg0, %c0_i32, %arg1, %c0_i32_0 : i32, i32, i32, i32
  }
  func.func @transform_1(%arg0: i32, %arg1: i32) -> (i32, i32, i32, i32) {
    %c0_i32 = arith.constant 0 : i32
    %c0_i32_0 = arith.constant 0 : i32
    %c0_i32_1 = arith.constant 0 : i32
    return %arg0, %c0_i32, %arg1, %c0_i32_0 : i32, i32, i32, i32
  }
  func.func @transform_2(%arg0: i32, %arg1: i32) -> (i32, i32, i32) {
    %c0_i32 = arith.constant 0 : i32
    %c0_i32_0 = arith.constant 0 : i32
    return %arg0, %arg1, %c0_i32 : i32, i32, i32
  }
}

</mosaic_0001>

<llo_original>
// kernel: tpu_custom_call.1
$region0: #{tpu_custom_call.1}
  #allocation0 [shape = 'u32[]', space=smem, size = 0x4, offset = 0x4, fixed_abs, tag = 'smem constant byte address 0x4 - core index']
  #allocation1 [shape = 'u32[72,128]{1,0:T(1,128)}', space=vmem, size = 0x9000, scoped, tag = 'internal scratch']
  %s0 = inlined_call_operand.hbm [shape: f32[2,4,2,128], index: 0, kind: input, shape index: {}]
  %s1 = inlined_call_operand.hbm [shape: f32[2,4,2,128], index: 1, kind: input, shape index: {}]
  %s2 = inlined_call_operand.hbm [shape: f32[2,2,128], index: 2, kind: output, shape index: {}]
  %s3 = sld [smem:[#allocation0]]
  $region49: #{tpu_custom_call.1} parent=0
    _
  %s5 = ssub.s32 1, %s3
  %s6 = scalar_select 0, %s5, %s3
  $region1: #{tpu_custom_call.1} parent=0
    #allocation2 [shape = 'u8[8192]{0}', space=vmem, size = 0x2000, scoped, tag = 'input window, operand 0']
    #allocation3 [shape = 's32[2]{0}', space=sflag, size = 0x8, scoped, tag = 'scoped memory for tpu_custom_call.1']
    #allocation4 [shape = 's32[2]{0}', space=sflag, size = 0x8, scoped, tag = 'scoped memory for tpu_custom_call.1']
    #allocation5 [shape = 'u8[8192]{0}', space=vmem, size = 0x2000, scoped, tag = 'input window, operand 1']
    #allocation6 [shape = 's32[2]{0}', space=sflag, size = 0x8, scoped, tag = 'scoped memory for tpu_custom_call.1']
    #allocation7 [shape = 'u8[2048]{0}', space=vmem, size = 0x800, scoped, tag = 'output window, operand 0']
    %7 = vsyncpa [#allocation3], 0
    %s8 = scalar_lea.sflag [#allocation3], 1
    %9 = vsyncpa %s8, 0
    %10 = vsyncpa [#allocation6], 0
    %s11 = scalar_lea.sflag [#allocation6], 1
    %12 = vsyncpa %s11, 0
    %13 = vsyncpa [#allocation4], 0
    %s14 = scalar_lea.sflag [#allocation4], 1
    %15 = vsyncpa %s14, 0
    loop: start=0, step=1, limit=4
    $region2: #{tpu_custom_call.1} parent=1 // loop_pre_header
      _
    $region3: #{tpu_custom_call.1} parent=1 // loop_header
      %s17 = sphi 0, %s21
      %p18 = scmp.ge.s32.totalorder %s17, 4
      %s24 = sphi 0, %s36
      %s25 = sphi 0, %s32
      %s26 = sphi 0, %s24
      %s27 = sphi 0, %s25
      %s28 = sphi 0, %s26
      %s29 = sphi 0, %s27
      %s41 = sphi 0, %s43
      %s44 = sphi 0, %s41
      %s45 = sphi 0, %s44
      %s61 = sphi 0, %s45
      %s69 = sphi 0, %s71
      %s72 = sphi 0, %s69
      %s73 = sphi 0, %s72
      %s89 = sphi 0, %s73
      %s97 = sphi 0, %s99
      %s100 = sphi 0, %s97
      %s101 = sphi 0, %s100
      %s117 = sphi 0, %s101
    $region4: #{tpu_custom_call.1} parent=1 // loop_header_branch
      %20 = sbr.rel (%p18) target = $region8
    $region5: #{tpu_custom_call.1} parent=1 // loop_body
      %s22 = ssub.s32 %s17, 1
      %s23 = ssub.s32 %s17, 2
      %s30 = sadd.s32 1, %s25
      %p31 = scmp.ge.s32.totalorder %s30, 1
      %s32 = scalar_select %p31, 0, %s30
      %s33 = sadd.s32 1, %s24
      %s34 = scalar_select %p31, %s33, %s24
      %p35 = scmp.ge.s32.totalorder %s34, 2
      %s36 = scalar_select %p35, 0, %s34
      %s37 = ssub.s32 %s24, %s36
      %s38 = ssub.s32 %s25, %s32
      %s39 = sor.u32 %s37, %s38
      %p40 = scmp.eq.s32.totalorder %s39, 0
      %s42 = sadd.s32 %s41, 1
      %s43 = scalar_select %p40, %s41, %s42
      %p46 = pneg %p40
      %p47 = scmp.eq.s32.totalorder %s17, 1
      %p48 = por %p46, %p47
      %p49 = scmp.ne.s32.totalorder %s41, %s44
      %p50 = scmp.eq.s32.totalorder %s17, 0
      %p51 = por %p49, %p50
      %p52 = scmp.ne.s32.totalorder %s41, %s44
      %p53 = scmp.eq.s32.totalorder %s22, 1
      %p54 = por %p52, %p53
      %p55 = scmp.ne.s32.totalorder %s44, %s45
      %p56 = scmp.eq.s32.totalorder %s22, 0
      %p57 = por %p55, %p56
      %p58 = scmp.ne.s32.totalorder %s44, %s45
      %p59 = scmp.eq.s32.totalorder %s23, 1
      %p60 = por %p58, %p59
      %p62 = scmp.ne.s32.totalorder %s45, %s61
      %p63 = scmp.eq.s32.totalorder %s23, 0
      %p64 = por %p62, %p63
      %s65 = ssub.s32 %s24, %s36
      %s66 = ssub.s32 %s25, %s32
      %s67 = sor.u32 %s65, %s66
      %p68 = scmp.eq.s32.totalorder %s67, 0
      %s70 = sadd.s32 %s69, 1
      %s71 = scalar_select %p68, %s69, %s70
      %p74 = pneg %p68
      %p75 = scmp.eq.s32.totalorder %s17, 1
      %p76 = por %p74, %p75
      %p77 = scmp.ne.s32.totalorder %s69, %s72
      %p78 = scmp.eq.s32.totalorder %s17, 0
      %p79 = por %p77, %p78
      %p80 = scmp.ne.s32.totalorder %s69, %s72
      %p81 = scmp.eq.s32.totalorder %s22, 1
      %p82 = por %p80, %p81
      %p83 = scmp.ne.s32.totalorder %s72, %s73
      %p84 = scmp.eq.s32.totalorder %s22, 0
      %p85 = por %p83, %p84
      %p86 = scmp.ne.s32.totalorder %s72, %s73
      %p87 = scmp.eq.s32.totalorder %s23, 1
      %p88 = por %p86, %p87
      %p90 = scmp.ne.s32.totalorder %s73, %s89
      %p91 = scmp.eq.s32.totalorder %s23, 0
      %p92 = por %p90, %p91
      %s93 = ssub.s32 %s24, %s36
      %s94 = ssub.s32 %s25, %s32
      %s95 = sor.u32 %s93, %s94
      %p96 = scmp.eq.s32.totalorder %s95, 0
      %s98 = sadd.s32 %s97, 1
      %s99 = scalar_select %p96, %s97, %s98
      %p102 = pneg %p96
      %p103 = scmp.eq.s32.totalorder %s17, 1
      %p104 = por %p102, %p103
      %p105 = scmp.ne.s32.totalorder %s97, %s100
      %p106 = scmp.eq.s32.totalorder %s17, 0
      %p107 = por %p105, %p106
      %p108 = scmp.ne.s32.totalorder %s97, %s100
      %p109 = scmp.eq.s32.totalorder %s22, 1
      %p110 = por %p108, %p109
      %p111 = scmp.ne.s32.totalorder %s100, %s101
      %p112 = scmp.eq.s32.totalorder %s22, 0
      %p113 = por %p111, %p112
      %p114 = scmp.ne.s32.totalorder %s100, %s101
      %p115 = scmp.eq.s32.totalorder %s23, 1
      %p116 = por %p114, %p115
      %p118 = scmp.ne.s32.totalorder %s101, %s117
      %p119 = scmp.eq.s32.totalorder %s23, 0
      %p120 = por %p118, %p119
      %p121 = scmp.le.s32.totalorder 1, %s17
      %p122 = scmp.lt.s32.totalorder %s17, 3
      %p123 = pnand %p121, %p122
      %p124 = pneg %p123
      // Predicated region
      $region9: #{tpu_custom_call.1} parent=5 // pred_check
        _
      $region10: #{tpu_custom_call.1} parent=5 // pred_check_branch
        %126 = sbr.rel (%p123) target = $region12
      $region11: #{tpu_custom_call.1} parent=5 // pred_region
        %s127 = ssub.s32 %s17, 1
      $region12: #{tpu_custom_call.1} parent=5 // pred_fallthru
        _
      %p128 = scmp.lt.s32.totalorder %s17, 2
      // Predicated region
      $region13: #{tpu_custom_call.1} parent=5 // pred_check
        %p129 = pneg %p128
      $region14: #{tpu_custom_call.1} parent=5 // pred_check_branch
        %131 = sbr.rel (%p129) target = $region16
      $region15: #{tpu_custom_call.1} parent=5 // pred_region
        // Predicated region
        $region17: #{tpu_custom_call.1} parent=15 // pred_check
          %p132 = pneg %p51
        $region18: #{tpu_custom_call.1} parent=15 // pred_check_branch
          %134 = sbr.rel (%p132) target = $region20
        $region19: #{tpu_custom_call.1} parent=15 // pred_region
          %s135 = sand.u32 %s41, 1
          %s136 = scalar_lea.sflag [#allocation3], %s135
          %s137 = sand.u32 %s41, 1
          %s138 = smul.addr %s137, 8
          %s139 = scalar_lea.vmem [#allocation2], %s138
          %141 = vsyncadd %s136, 0
          %s142 = smul.addr %s24, 4
          %s143 = sadd.s32 %s25, %s142
          %s144 = smul.addr %s143, 2
          %s145 = scalar_lea.hbm %s0, %s144
          %s146 = sshll.u32 %s145, 4
          %s147 = int_to_ptr.hbm [resolvable:$true] %s146
          %s148 = sshll.u32 %s139, 4
          %s149 = int_to_ptr.vmem [resolvable:$true] %s148
          %154 = dma.hbm_to_vmem [thread:$0]  %s147, 128, %s149, %s136, 32, 32, 2
        $region20: #{tpu_custom_call.1} parent=15 // pred_fallthru
          _
        // Predicated region
        $region21: #{tpu_custom_call.1} parent=15 // pred_check
          %p155 = pneg %p79
        $region22: #{tpu_custom_call.1} parent=15 // pred_check_branch
          %157 = sbr.rel (%p155) target = $region24
        $region23: #{tpu_custom_call.1} parent=15 // pred_region
          %s158 = sand.u32 %s69, 1
          %s159 = scalar_lea.sflag [#allocation6], %s158
          %s160 = sand.u32 %s69, 1
          %s161 = smul.addr %s160, 8
          %s162 = scalar_lea.vmem [#allocation5], %s161
          %164 = vsyncadd %s159, 0
          %s165 = smul.addr %s24, 4
          %s166 = sadd.s32 %s25, %s165
          %s167 = smul.addr %s166, 2
          %s168 = scalar_lea.hbm %s1, %s167
          %s169 = sshll.u32 %s168, 4
          %s170 = int_to_ptr.hbm [resolvable:$true] %s169
          %s171 = sshll.u32 %s162, 4
          %s172 = int_to_ptr.vmem [resolvable:$true] %s171
          %177 = dma.hbm_to_vmem [thread:$0]  %s170, 128, %s172, %s159, 32, 32, 2
        $region24: #{tpu_custom_call.1} parent=15 // pred_fallthru
          _
      $region16: #{tpu_custom_call.1} parent=5 // pred_fallthru
        _
      %p178 = scmp.le.s32.totalorder 1, %s17
      %p179 = scmp.lt.s32.totalorder %s17, 3
      %p180 = pnand %p178, %p179
      %p181 = pneg %p180
      // Predicated region
      $region25: #{tpu_custom_call.1} parent=5 // pred_check
        _
      $region26: #{tpu_custom_call.1} parent=5 // pred_check_branch
        %183 = sbr.rel (%p180) target = $region28
      $region27: #{tpu_custom_call.1} parent=5 // pred_region
        %s184 = ssub.s32 %s17, 1
        %s185 = sand.u32 %s44, 1
        %s186 = scalar_lea.sflag [#allocation3], %s185
        %s187 = sand.u32 %s44, 1
        %s188 = smul.addr %s187, 8
        %s189 = scalar_lea.vmem [#allocation2], %s188
        // Predicated region
        $region29: #{tpu_custom_call.1} parent=27 // pred_check
          %p190 = pneg %p57
        $region30: #{tpu_custom_call.1} parent=27 // pred_check_branch
          %192 = sbr.rel (%p190) target = $region32
        $region31: #{tpu_custom_call.1} parent=27 // pred_region
          %194 = dma.done %s186, 128
        $region32: #{tpu_custom_call.1} parent=27 // pred_fallthru
          _
        %s195 = sand.u32 %s72, 1
        %s196 = scalar_lea.sflag [#allocation6], %s195
        %s197 = sand.u32 %s72, 1
        %s198 = smul.addr %s197, 8
        %s199 = scalar_lea.vmem [#allocation5], %s198
        // Predicated region
        $region33: #{tpu_custom_call.1} parent=27 // pred_check
          %p200 = pneg %p85
        $region34: #{tpu_custom_call.1} parent=27 // pred_check_branch
          %202 = sbr.rel (%p200) target = $region36
        $region35: #{tpu_custom_call.1} parent=27 // pred_region
          %204 = dma.done %s196, 128
        $region36: #{tpu_custom_call.1} parent=27 // pred_fallthru
          _
        %s205 = sand.u32 %s44, 1
        %s206 = scalar_lea.sflag [#allocation3], %s205
        %s207 = sand.u32 %s44, 1
        %s208 = smul.addr %s207, 8
        %s209 = scalar_lea.vmem [#allocation2], %s208
        %p210 = pneg %p57
        %p211 = pneg %p54
        %s212 = sand.u32 %s72, 1
        %s213 = scalar_lea.sflag [#allocation6], %s212
        %s214 = sand.u32 %s72, 1
        %s215 = smul.addr %s214, 8
        %s216 = scalar_lea.vmem [#allocation5], %s215
        %p217 = pneg %p85
        %p218 = pneg %p82
        %p219 = pneg %p113
        %p220 = pneg %p110
        %s221 = sand.u32 %s100, 1
        %s222 = scalar_lea.sflag [#allocation4], %s221
        %s223 = sand.u32 %s100, 1
        %s224 = smul.addr %s223, 2
        %s225 = scalar_lea.vmem [#allocation7], %s224
        %v226 = vld [vmem:[%s189] sm:$0x3]
        %v227 = vld [vmem:[%s199] sm:$0x3]
        %v228 = vsub.f32 %v226, %v227
        %v229 = vmul.f32 %v228, %v228
        %s230 = scalar_lea.vmem %s189, 2 [#allocation2]
        %v231 = vld [vmem:[%s230] sm:$0x3]
        %s232 = scalar_lea.vmem %s199, 2 [#allocation5]
        %v233 = vld [vmem:[%s232] sm:$0x3]
        %v234 = vsub.f32 %v231, %v233
        %v235 = vmul.f32 %v234, %v234
        %v236 = vadd.f32 %v229, %v235
        %s237 = scalar_lea.vmem %s189, 4 [#allocation2]
        %v238 = vld [vmem:[%s237] sm:$0x3]
        %s239 = scalar_lea.vmem %s199, 4 [#allocation5]
        %v240 = vld [vmem:[%s239] sm:$0x3]
        %v241 = vsub.f32 %v238, %v240
        %v242 = vmul.f32 %v241, %v241
        %v243 = vadd.f32 %v236, %v242
        %s244 = scalar_lea.vmem %s189, 6 [#allocation2]
        %v245 = vld [vmem:[%s244] sm:$0x3]
        %s246 = scalar_lea.vmem %s199, 6 [#allocation5]
        %v247 = vld [vmem:[%s246] sm:$0x3]
        %v248 = vsub.f32 %v245, %v247
        %v249 = vmul.f32 %v248, %v248
        %v250 = vadd.f32 %v243, %v249
        %v251 = vmul.f32 %v250, 0.25
        %252 = vst [vmem:[%s225] sm:$0x3] %v251
        %s253 = sand.u32 %s100, 1
        %s254 = scalar_lea.sflag [#allocation4], %s253
        %s255 = sand.u32 %s100, 1
        %s256 = smul.addr %s255, 2
        %s257 = scalar_lea.vmem [#allocation7], %s256
        // Predicated region
        $region37: #{tpu_custom_call.1} parent=27 // pred_check
          %p258 = pneg %p110
        $region38: #{tpu_custom_call.1} parent=27 // pred_check_branch
          %260 = sbr.rel (%p258) target = $region40
        $region39: #{tpu_custom_call.1} parent=27 // pred_region
          %262 = vsyncadd %s254, 0
          %s263 = sadd.s32 %s27, %s26
          %s264 = smul.addr %s263, 2
          %s265 = scalar_lea.hbm %s2, %s264
          %s267 = sshll.u32 %s257, 4
          %s268 = int_to_ptr.vmem [resolvable:$true] %s267
          %s269 = sshll.u32 %s265, 4
          %s270 = int_to_ptr.hbm [resolvable:$true] %s269
          %272 = dma.vmem_to_hbm [thread:$0]  %s268, 32, %s270, %s254
        $region40: #{tpu_custom_call.1} parent=27 // pred_fallthru
          _
      $region28: #{tpu_custom_call.1} parent=5 // pred_fallthru
        _
      %p273 = scmp.le.s32.totalorder 2, %s17
      // Predicated region
      $region41: #{tpu_custom_call.1} parent=5 // pred_check
        %p274 = pneg %p273
      $region42: #{tpu_custom_call.1} parent=5 // pred_check_branch
        %276 = sbr.rel (%p274) target = $region44
      $region43: #{tpu_custom_call.1} parent=5 // pred_region
        %s277 = ssub.s32 %s17, 2
        // Predicated region
        $region45: #{tpu_custom_call.1} parent=43 // pred_check
          %p278 = pneg %p116
        $region46: #{tpu_custom_call.1} parent=43 // pred_check_branch
          %280 = sbr.rel (%p278) target = $region48
        $region47: #{tpu_custom_call.1} parent=43 // pred_region
          %s281 = sand.u32 %s101, 1
          %s282 = scalar_lea.sflag [#allocation4], %s281
          %s283 = sand.u32 %s101, 1
          %s284 = smul.addr %s283, 2
          %s285 = scalar_lea.vmem [#allocation7], %s284
          %287 = dma.done %s282, 32
        $region48: #{tpu_custom_call.1} parent=43 // pred_fallthru
          _
      $region44: #{tpu_custom_call.1} parent=5 // pred_fallthru
        _
    $region6: #{tpu_custom_call.1} parent=1 // loop_footer
      %s21 = sadd.s32 1, %s17
    $region7: #{tpu_custom_call.1} parent=1 // loop_footer_branch
      %16 = sbr.rel target = $region3
    $region8: #{tpu_custom_call.1} parent=1 // loop_exit
      _
    %288 = vsyncpa [#allocation3], 1
    %s289 = scalar_lea.sflag [#allocation3], 1
    %290 = vsyncpa %s289, 1
    %291 = vsyncpa [#allocation6], 1
    %s292 = scalar_lea.sflag [#allocation6], 1
    %293 = vsyncpa %s292, 1
    %294 = vsyncpa [#allocation4], 1
    %s295 = scalar_lea.sflag [#allocation4], 1
    %296 = vsyncpa %s295, 1

</llo_original>
